<compile_context>
chip_gen: v7x
topology: tpu7x:2x2x1
jax: 0.10.0
libtpu: 0.0.40
codegen_flags: <defaults>
</compile_context>

<pallas_src>
import functools

import jax
import jax.numpy as jnp
from jax.experimental import pallas as pl
from jax.experimental.pallas import tpu as pltpu


# ---------------------------------------------------------------------------
# helpers
# ---------------------------------------------------------------------------
def _round_up(x: int, m: int) -> int:
    return (x + m - 1) // m * m


def _pad2d(a, rows: int, cols: int):
    pr, pc = rows - a.shape[0], cols - a.shape[1]
    if pr == 0 and pc == 0:
        return a
    return jnp.pad(a, ((0, pr), (0, pc)))


def _vmem_capacity_bytes() -> int:
    try:
        return int(pltpu.get_tpu_info().vmem_capacity_bytes)
    except Exception:
        return 64 * 1024 * 1024  # conservative (v7x-sized) fallback


def _fused_budget_bytes() -> int:
    # ~96 MiB on 128 MiB chips (v5e/v6e), ~48 MiB on v7x (64 MiB physical).
    return (_vmem_capacity_bytes() * 3) // 4


_MAX_TM = 256    # matches v6e/v7x 2x256x256 MXU; harmless on v5e (128x128)
_MAX_TN = 512
_MAX_TK = 2048   # single-block K up to here; beyond, K is tiled at 2048


def _padded_batch(B: int, use_bf16: bool) -> int:
    sub = 16 if use_bf16 else 8          # bf16 packs 2 rows per sublane
    if B <= _MAX_TM:
        return _round_up(max(B, sub), sub)
    return _round_up(B, _MAX_TM)


def _fused_footprint_bytes(B, dims, use_bf16) -> int:
    b_pad = _padded_batch(B, use_bf16)
    dp = [_round_up(d, 128) for d in dims]
    opb = 2 if use_bf16 else 4
    n = b_pad * dp[0] * opb                       # input (operand dtype)
    for i in range(len(dims) - 1):
        n += dp[i] * dp[i + 1] * opb              # weight (operand dtype)
        n += dp[i + 1] * 4                        # bias (f32)
        n += b_pad * dp[i + 1] * 4                # f32 activation temp
    n += b_pad * dp[-1] * 4                       # output (f32)
    return n


# ---------------------------------------------------------------------------
# Fused whole-MLP kernel (single pallas_call, everything resident in VMEM)
# ---------------------------------------------------------------------------
def _fused_mlp_kernel(*refs, n_layers: int):
    x_ref, o_ref = refs[0], refs[-1]
    wb = refs[1:-1]
    h = x_ref[...]                                  # operand dtype (bf16/f32)
    y = None
    for i in range(n_layers):
        w = wb[2 * i][...]
        b = wb[2 * i + 1][...]                      # f32
        y = jnp.dot(h, w, preferred_element_type=jnp.float32) + b
        if i < n_layers - 1:
            # ReLU in f32 (v5e-safe VPU path), re-cast for the next MXU op.
            h = jnp.maximum(y, 0.0).astype(w.dtype)
    o_ref[...] = y.astype(o_ref.dtype)


def fused_mlp(x_flat, params, *, use_bf16: bool):
    """x_flat: (B, Din) f32; params: list of (w:(din,dout), b:(1,dout))."""
    B, din = x_flat.shape
    b_pad = _padded_batch(B, use_bf16)
    dims = [din] + [w.shape[1] for w, _ in params]
    dp = [_round_up(d, 128) for d in dims]
    op_dtype = jnp.bfloat16 if use_bf16 else jnp.float32

    inputs = [_pad2d(x_flat, b_pad, dp[0]).astype(op_dtype)]
    for li, (w, b) in enumerate(params):
        inputs.append(_pad2d(w, dp[li], dp[li + 1]).astype(op_dtype))
        inputs.append(_pad2d(b, 1, dp[li + 1]).astype(jnp.float32))

    footprint = _fused_footprint_bytes(B, dims, use_bf16)
    cap = _vmem_capacity_bytes()
    vmem_limit = int(min(cap * 85 // 100, max(32 << 20, footprint + (16 << 20))))

    flops = 2 * b_pad * sum(dp[i] * dp[i + 1] for i in range(len(params)))
    bytes_accessed = int(sum(int(a.size) * a.dtype.itemsize for a in inputs)
                         + 4 * b_pad * dp[-1])

    # TODO(synk): for large-batch fused nets, pipeline a grid axis over layers
    # so layer i+1's weight DMA overlaps layer i's matmul; at small batch the
    # whole-VMEM no-grid body is already DMA-bound and this is irrelevant.
    kernel = functools.partial(_fused_mlp_kernel, n_layers=len(params))
    out = pl.pallas_call(
        kernel,
        out_shape=jax.ShapeDtypeStruct((b_pad, dp[-1]), jnp.float32),
        compiler_params=pltpu.CompilerParams(vmem_limit_bytes=vmem_limit),
        cost_estimate=pl.CostEstimate(
            flops=flops, transcendentals=0, bytes_accessed=bytes_accessed),
    )(*inputs)
    return out[:B, :dims[-1]]


# ---------------------------------------------------------------------------
# Tiled Linear(+ReLU) kernels for layers too large to keep whole in VMEM
# ---------------------------------------------------------------------------
def _tiled_linear_kernel_inplace(x_ref, w_ref, b_ref, o_ref, *, apply_relu):
    # f32 output block is resident across K -> accumulate in place, no scratch.
    k = pl.program_id(2)

    @pl.when(k == 0)
    def _init():
        o_ref[...] = jnp.broadcast_to(b_ref[...], o_ref.shape)

    o_ref[...] += jnp.dot(x_ref[...], w_ref[...],
                          preferred_element_type=jnp.float32)

    if apply_relu:
        @pl.when(k == pl.num_programs(2) - 1)
        def _finalize():
            o_ref[...] = jnp.maximum(o_ref[...], 0.0)


def _tiled_linear_kernel_acc(x_ref, w_ref, b_ref, o_ref, acc_ref, *, apply_relu):
    # Lower-precision output: accumulate in an f32 VMEM scratch, cast at the end.
    k = pl.program_id(2)

    @pl.when(k == 0)
    def _init():
        acc_ref[...] = jnp.broadcast_to(b_ref[...], acc_ref.shape)

    acc_ref[...] += jnp.dot(x_ref[...], w_ref[...],
                            preferred_element_type=jnp.float32)

    @pl.when(k == pl.num_programs(2) - 1)
    def _finalize():
        y = acc_ref[...]
        if apply_relu:
            y = jnp.maximum(y, 0.0)                 # epilogue stays f32
        o_ref[...] = y.astype(o_ref.dtype)


def tiled_linear_padded(x_p, w, b, *, apply_relu: bool, out_dtype):
    """x_p: (m_pad, k_in) already padded (operand dtype); w: (k,n); b: (1,n).
    Returns padded (m_pad, n_pad) output in out_dtype (no slicing here)."""
    m_pad, k_in = x_p.shape
    _, n_true = w.shape
    n_pad = _round_up(n_true, 128)

    # --- K tiling: one block up to _MAX_TK, else pad to a multiple of it.
    if k_in <= _MAX_TK:
        tk, k_pad = k_in, k_in
    else:
        tk = _MAX_TK
        k_pad = _round_up(k_in, tk)
        x_p = _pad2d(x_p, m_pad, k_pad)

    # --- M tiling.
    tm = m_pad if m_pad <= _MAX_TM else _MAX_TM

    # --- N tiling.
    if n_pad <= _MAX_TN:
        tn = n_pad
    else:
        tn = 128
        for c in (_MAX_TN, 256, 128):
            if n_pad % c == 0:
                tn = c
                break
    # v7x megacore: guarantee >= 2 blocks along a "parallel" axis when possible.
    if m_pad // tm == 1 and n_pad // tn == 1 and n_pad >= 256:
        tn = n_pad // 2 if (n_pad // 2) % 128 == 0 else 128

    w_p = _pad2d(w, k_pad, n_pad).astype(x_p.dtype)
    b_p = _pad2d(b, 1, n_pad).astype(jnp.float32)

    grid = (m_pad // tm, n_pad // tn, k_pad // tk)
    gm, gn, _ = grid
    out_itemsize = jnp.dtype(out_dtype).itemsize
    cost = pl.CostEstimate(
        flops=2 * m_pad * n_pad * k_pad,
        transcendentals=0,
        bytes_accessed=int(x_p.size * x_p.dtype.itemsize * gn     # x re-read per N block
                           + w_p.size * w_p.dtype.itemsize * gm   # w re-read per M block
                           + b_p.size * 4 * gm
                           + m_pad * n_pad * out_itemsize))

    common = dict(
        out_shape=jax.ShapeDtypeStruct((m_pad, n_pad), out_dtype),
        grid=grid,
        in_specs=[
            pl.BlockSpec((tm, tk), lambda i, j, k: (i, k)),
            pl.BlockSpec((tk, tn), lambda i, j, k: (k, j)),
            pl.BlockSpec((1, tn), lambda i, j, k: (0, j)),
        ],
        out_specs=pl.BlockSpec((tm, tn), lambda i, j, k: (i, j)),
        compiler_params=pltpu.CompilerParams(
            dimension_semantics=("parallel", "parallel", "arbitrary")),
        cost_estimate=cost,
    )

    if jnp.dtype(out_dtype) == jnp.dtype(jnp.float32):
        kernel = functools.partial(_tiled_linear_kernel_inplace,
                                   apply_relu=apply_relu)
        return pl.pallas_call(kernel, **common)(x_p, w_p, b_p)

    kernel = functools.partial(_tiled_linear_kernel_acc, apply_relu=apply_relu)
    return pl.pallas_call(
        kernel,
        scratch_shapes=[pltpu.VMEM((tm, tn), jnp.float32)],
        **common,
    )(x_p, w_p, b_p)


# ---------------------------------------------------------------------------
# Model: parameter init + forward
# ---------------------------------------------------------------------------
def init_fc_params(key, hidden_sizes, input_dim, num_classes):
    """Deterministic PyTorch-Linear-style (Kaiming-uniform) init."""
    params = []
    dims = [input_dim] + list(hidden_sizes) + [num_classes]
    for din, dout in zip(dims[:-1], dims[1:]):
        key, kw, kb = jax.random.split(key, 3)
        bound = 1.0 / jnp.sqrt(jnp.float32(din))
        w = jax.random.uniform(kw, (din, dout), jnp.float32, -bound, bound)
        b = jax.random.uniform(kb, (1, dout), jnp.float32, -bound, bound)
        params.append((w, b))
    return params


def fully_connected_forward(x, params, *, use_bf16: bool = True,
                            force_tiled: bool = False):
    # x: (B, ...) -> flatten to (B, input_dim), matching x.view(x.size(0), -1)
    B = x.shape[0]
    h = x.reshape(B, -1).astype(jnp.float32)
    dims = [h.shape[1]] + [w.shape[1] for w, _ in params]

    if (not force_tiled
            and _fused_footprint_bytes(B, dims, use_bf16) <= _fused_budget_bytes()):
        return fused_mlp(h, params, use_bf16=use_bf16)

    # Tiled fallback: pad + cast the activation once, chain every layer on
    # padded activations, slice only after the last layer.
    op_dtype = jnp.bfloat16 if use_bf16 else jnp.float32
    m_pad = _padded_batch(B, use_bf16)
    h_p = _pad2d(h, m_pad, _round_up(dims[0], 128)).astype(op_dtype)

    n_layers = len(params)
    for i, (w, b) in enumerate(params):
        last = i == n_layers - 1
        h_p = tiled_linear_padded(
            h_p, w, b,
            apply_relu=not last,
            out_dtype=jnp.float32 if last else op_dtype)
    return h_p[:B, :dims[-1]]


# ---------------------------------------------------------------------------
if __name__ == "__main__":
    # MNIST-like setup: batch=2, input 1x28x28 (=784), hidden [32, 32], 10 classes.
    key = jax.random.PRNGKey(0)
    key, kx = jax.random.split(key)
    hidden_sizes = [32, 32]
    input_dim = 28 * 28
    num_classes = 10

    x = jax.random.normal(kx, (2, 1, 28, 28), jnp.float32)
    params = init_fc_params(key, hidden_sizes, input_dim, num_classes)

    # Reference in plain JAX (f32).
    ref = x.reshape(2, -1)
    for i, (w, b) in enumerate(params):
        ref = ref @ w + b
        if i < len(params) - 1:
            ref = jnp.maximum(ref, 0.0)

    # Exact f32-operand paths (tight tolerance; verifies padding / reduction /
    # chained-padded-activation plumbing bit-for-bit against the math).
    out_f32_fused = jax.block_until_ready(
        fully_connected_forward(x, params, use_bf16=False))
    out_f32_tiled = jax.block_until_ready(
        fully_connected_forward(x, params, use_bf16=False, force_tiled=True))
    assert out_f32_fused.shape == (2, num_classes), out_f32_fused.shape
    assert out_f32_fused.dtype == jnp.float32
    assert out_f32_tiled.shape == (2, num_classes), out_f32_tiled.shape
    assert jnp.allclose(out_f32_fused, ref, atol=1e-4, rtol=1e-4)
    assert jnp.allclose(out_f32_tiled, ref, atol=1e-4, rtol=1e-4)

    # bf16-operand paths (default: full MXU rate on v6e/v7x, half weight DMA
    # bytes; f32 accumulation so tolerance is loose but small).
    out_bf16_fused = jax.block_until_ready(fully_connected_forward(x, params))
    out_bf16_tiled = jax.block_until_ready(
        fully_connected_forward(x, params, force_tiled=True))
    assert out_bf16_fused.shape == (2, num_classes), out_bf16_fused.shape
    assert out_bf16_fused.dtype == jnp.float32
    assert jnp.allclose(out_bf16_fused, ref, atol=3e-2, rtol=3e-2)
    assert jnp.allclose(out_bf16_tiled, ref, atol=3e-2, rtol=3e-2)

    print("KERNEL_OK")
</pallas_src>

<mosaic_0001>
module attributes {stable_mosaic.version = 11 : i64} {
  func.func @_fused_mlp_kernel(%arg0: memref<8x896xf32, #tpu.memory_space<vmem>>, %arg1: memref<896x128xf32, #tpu.memory_space<vmem>>, %arg2: memref<1x128xf32, #tpu.memory_space<vmem>>, %arg3: memref<128x128xf32, #tpu.memory_space<vmem>>, %arg4: memref<1x128xf32, #tpu.memory_space<vmem>>, %arg5: memref<128x128xf32, #tpu.memory_space<vmem>>, %arg6: memref<1x128xf32, #tpu.memory_space<vmem>>, %arg7: memref<8x128xf32, #tpu.memory_space<vmem>>) attributes {dimension_semantics = [], scalar_prefetch = 0 : i64, scratch_operands = 0 : i64, tpu.core_type = #tpu.core_type<tc>} {
    %c0 = arith.constant 0 : index
    %c0_0 = arith.constant 0 : index
    %0 = vector.load %arg0[%c0, %c0_0] : memref<8x896xf32, #tpu.memory_space<vmem>>, vector<8x896xf32>
    %c0_1 = arith.constant 0 : index
    %c0_2 = arith.constant 0 : index
    %1 = vector.load %arg1[%c0_1, %c0_2] : memref<896x128xf32, #tpu.memory_space<vmem>>, vector<896x128xf32>
    %c0_3 = arith.constant 0 : index
    %c0_4 = arith.constant 0 : index
    %2 = vector.load %arg2[%c0_3, %c0_4] : memref<1x128xf32, #tpu.memory_space<vmem>>, vector<1x128xf32>
    %cst = arith.constant dense<0.000000e+00> : vector<8x128xf32>
    %3 = tpu.matmul %0, %1, %cst {dimension_numbers = #tpu.dot_dimension_numbers<[1], [0], [0], [1], [0, 0, 1, 1], [], []>} : vector<8x896xf32>, vector<896x128xf32>, vector<8x128xf32> -> vector<8x128xf32>
    %4 = vector.broadcast %2 : vector<1x128xf32> to vector<8x128xf32>
    %5 = arith.addf %3, %4 : vector<8x128xf32>
    %cst_5 = arith.constant 0.000000e+00 : f32
    %6 = vector.broadcast %cst_5 : f32 to vector<8x128xf32>
    %7 = arith.maximumf %5, %6 : vector<8x128xf32>
    %c0_6 = arith.constant 0 : index
    %c0_7 = arith.constant 0 : index
    %8 = vector.load %arg3[%c0_6, %c0_7] : memref<128x128xf32, #tpu.memory_space<vmem>>, vector<128x128xf32>
    %c0_8 = arith.constant 0 : index
    %c0_9 = arith.constant 0 : index
    %9 = vector.load %arg4[%c0_8, %c0_9] : memref<1x128xf32, #tpu.memory_space<vmem>>, vector<1x128xf32>
    %cst_10 = arith.constant dense<0.000000e+00> : vector<8x128xf32>
    %10 = tpu.matmul %7, %8, %cst_10 {dimension_numbers = #tpu.dot_dimension_numbers<[1], [0], [0], [1], [0, 0, 1, 1], [], []>} : vector<8x128xf32>, vector<128x128xf32>, vector<8x128xf32> -> vector<8x128xf32>
    %11 = vector.broadcast %9 : vector<1x128xf32> to vector<8x128xf32>
    %12 = arith.addf %10, %11 : vector<8x128xf32>
    %cst_11 = arith.constant 0.000000e+00 : f32
    %13 = vector.broadcast %cst_11 : f32 to vector<8x128xf32>
    %14 = arith.maximumf %12, %13 : vector<8x128xf32>
    %c0_12 = arith.constant 0 : index
    %c0_13 = arith.constant 0 : index
    %15 = vector.load %arg5[%c0_12, %c0_13] : memref<128x128xf32, #tpu.memory_space<vmem>>, vector<128x128xf32>
    %c0_14 = arith.constant 0 : index
    %c0_15 = arith.constant 0 : index
    %16 = vector.load %arg6[%c0_14, %c0_15] : memref<1x128xf32, #tpu.memory_space<vmem>>, vector<1x128xf32>
    %cst_16 = arith.constant dense<0.000000e+00> : vector<8x128xf32>
    %17 = tpu.matmul %14, %15, %cst_16 {dimension_numbers = #tpu.dot_dimension_numbers<[1], [0], [0], [1], [0, 0, 1, 1], [], []>} : vector<8x128xf32>, vector<128x128xf32>, vector<8x128xf32> -> vector<8x128xf32>
    %18 = vector.broadcast %16 : vector<1x128xf32> to vector<8x128xf32>
    %19 = arith.addf %17, %18 : vector<8x128xf32>
    %c0_17 = arith.constant 0 : index
    %c0_18 = arith.constant 0 : index
    %20 = vector.load %arg7[%c0_17, %c0_18] : memref<8x128xf32, #tpu.memory_space<vmem>>, vector<8x128xf32>
    tpu.vector_store %arg7[%c0_17, %c0_18], %19 {strides = array<i32>} : memref<8x128xf32, #tpu.memory_space<vmem>>, vector<8x128xf32>,
    return
  }
}

</mosaic_0001>

<llo_original>
// kernel: tpu_custom_call.1
$region0: #{tpu_custom_call.1}
  #allocation0 [shape = 'u32[]', space=smem, size = 0x4, offset = 0x4, fixed_abs, tag = 'smem constant byte address 0x4 - core index']
  #allocation1 [shape = 'u32[144,128]{1,0:T(1,128)}', space=vmem, size = 0x12000, scoped, tag = 'internal scratch']
  %s0 = inlined_call_operand.hbm [shape: f32[8,896], index: 0, kind: input, shape index: {}]
  %s1 = inlined_call_operand.hbm [shape: f32[896,128], index: 1, kind: input, shape index: {}]
  %s2 = inlined_call_operand.vmem [shape: f32[1,128], index: 2, kind: input, shape index: {}]
  %s3 = inlined_call_operand.hbm [shape: f32[128,128], index: 3, kind: input, shape index: {}]
  %s4 = inlined_call_operand.vmem [shape: f32[1,128], index: 4, kind: input, shape index: {}]
  %s5 = inlined_call_operand.hbm [shape: f32[128,128], index: 5, kind: input, shape index: {}]
  %s6 = inlined_call_operand.vmem [shape: f32[1,128], index: 6, kind: input, shape index: {}]
  %s7 = inlined_call_operand.hbm [shape: f32[8,128], index: 7, kind: output, shape index: {}]
  %s8 = sld [smem:[#allocation0]]
  $region54: #{tpu_custom_call.1} parent=0
    _
  %s10 = ssub.s32 1, %s8
  %s11 = scalar_select 0, %s10, %s8
  $region1: #{tpu_custom_call.1} parent=0
    #allocation2 [shape = 'u8[28672]{0}', space=vmem, size = 0x7000, scoped, tag = 'input window, operand 0, single buffered']
    #allocation3 [shape = 's32[1]{0}', space=sflag, size = 0x4, scoped, tag = 'scoped memory for tpu_custom_call.1']
    #allocation4 [shape = 's32[1]{0}', space=sflag, size = 0x4, scoped, tag = 'scoped memory for tpu_custom_call.1']
    #allocation5 [shape = 'u8[458752]{0}', space=vmem, size = 0x70000, scoped, tag = 'input window, operand 1, single buffered']
    #allocation6 [shape = 's32[1]{0}', space=sflag, size = 0x4, scoped, tag = 'scoped memory for tpu_custom_call.1']
    #allocation7 [shape = 'u8[65536]{0}', space=vmem, size = 0x10000, scoped, tag = 'input window, operand 3, single buffered']
    #allocation8 [shape = 'u8[65536]{0}', space=vmem, size = 0x10000, scoped, tag = 'input window, operand 5, single buffered']
    #allocation9 [shape = 's32[1]{0}', space=sflag, size = 0x4, scoped, tag = 'scoped memory for tpu_custom_call.1']
    #allocation10 [shape = 'u8[4096]{0}', space=vmem, size = 0x1000, scoped, tag = 'output window, operand 0, single buffered']
    %12 = vsyncpa [#allocation3], 0
    %13 = vsyncpa [#allocation6], 0
    %14 = vsyncpa [#allocation9], 0
    %15 = vsyncpa [#allocation4], 0
    // Predicated region
    $region2: #{tpu_custom_call.1} parent=1 // pred_check
      _
    $region3: #{tpu_custom_call.1} parent=1 // pred_check_branch
      %17 = sbr.rel (0) target = $region5
    $region4: #{tpu_custom_call.1} parent=1 // pred_region
      %s19 = ssub.s32 896, 896
      %20 = vsyncadd [#allocation3], %s19
      %s22 = sshll.u32 [#allocation2], 4
      %s23 = int_to_ptr.vmem [resolvable:$true] %s22
      %25 = dma.hbm_to_vmem [thread:$0]  %s0, 896, %s23, [#allocation3]
    $region5: #{tpu_custom_call.1} parent=1 // pred_fallthru
      _
    // Predicated region
    $region6: #{tpu_custom_call.1} parent=1 // pred_check
      _
    $region7: #{tpu_custom_call.1} parent=1 // pred_check_branch
      %27 = sbr.rel (0) target = $region9
    $region8: #{tpu_custom_call.1} parent=1 // pred_region
      %s29 = ssub.s32 14336, 14336
      %30 = vsyncadd [#allocation6], %s29
      %s31 = sshll.u32 [#allocation5], 4
      %s32 = int_to_ptr.vmem [resolvable:$true] %s31
      %37 = dma.hbm_to_vmem [thread:$0]  %s1, 14336, %s32, [#allocation6], 128, 128, 8
    $region9: #{tpu_custom_call.1} parent=1 // pred_fallthru
      _
    // Predicated region
    $region10: #{tpu_custom_call.1} parent=1 // pred_check
      _
    $region11: #{tpu_custom_call.1} parent=1 // pred_check_branch
      %39 = sbr.rel (0) target = $region13
    $region12: #{tpu_custom_call.1} parent=1 // pred_region
      _
    $region13: #{tpu_custom_call.1} parent=1 // pred_fallthru
      _
    // Predicated region
    $region14: #{tpu_custom_call.1} parent=1 // pred_check
      _
    $region15: #{tpu_custom_call.1} parent=1 // pred_check_branch
      %41 = sbr.rel (0) target = $region17
    $region16: #{tpu_custom_call.1} parent=1 // pred_region
      %s43 = ssub.s32 2048, 2048
      %44 = vsyncadd [#allocation6], %s43
      %s45 = sshll.u32 [#allocation7], 4
      %s46 = int_to_ptr.vmem [resolvable:$true] %s45
      %51 = dma.hbm_to_vmem [thread:$0]  %s3, 2048, %s46, [#allocation6], 128, 128, 8
    $region17: #{tpu_custom_call.1} parent=1 // pred_fallthru
      _
    // Predicated region
    $region18: #{tpu_custom_call.1} parent=1 // pred_check
      _
    $region19: #{tpu_custom_call.1} parent=1 // pred_check_branch
      %53 = sbr.rel (0) target = $region21
    $region20: #{tpu_custom_call.1} parent=1 // pred_region
      _
    $region21: #{tpu_custom_call.1} parent=1 // pred_fallthru
      _
    // Predicated region
    $region22: #{tpu_custom_call.1} parent=1 // pred_check
      _
    $region23: #{tpu_custom_call.1} parent=1 // pred_check_branch
      %55 = sbr.rel (0) target = $region25
    $region24: #{tpu_custom_call.1} parent=1 // pred_region
      %s57 = ssub.s32 2048, 2048
      %58 = vsyncadd [#allocation9], %s57
      %s59 = sshll.u32 [#allocation8], 4
      %s60 = int_to_ptr.vmem [resolvable:$true] %s59
      %65 = dma.hbm_to_vmem [thread:$0]  %s5, 2048, %s60, [#allocation9], 128, 128, 8
    $region25: #{tpu_custom_call.1} parent=1 // pred_fallthru
      _
    // Predicated region
    $region26: #{tpu_custom_call.1} parent=1 // pred_check
      _
    $region27: #{tpu_custom_call.1} parent=1 // pred_check_branch
      %67 = sbr.rel (0) target = $region29
    $region28: #{tpu_custom_call.1} parent=1 // pred_region
      _
    $region29: #{tpu_custom_call.1} parent=1 // pred_fallthru
      _
    // Predicated region
    $region30: #{tpu_custom_call.1} parent=1 // pred_check
      _
    $region31: #{tpu_custom_call.1} parent=1 // pred_check_branch
      %69 = sbr.rel (0) target = $region33
    $region32: #{tpu_custom_call.1} parent=1 // pred_region
      %70 = dma.done [#allocation3], 896
    $region33: #{tpu_custom_call.1} parent=1 // pred_fallthru
      _
    // Predicated region
    $region34: #{tpu_custom_call.1} parent=1 // pred_check
      _
    $region35: #{tpu_custom_call.1} parent=1 // pred_check_branch
      %72 = sbr.rel (0) target = $region37
    $region36: #{tpu_custom_call.1} parent=1 // pred_region
      %73 = dma.done [#allocation6], 14336
    $region37: #{tpu_custom_call.1} parent=1 // pred_fallthru
      _
    // Predicated region
    $region38: #{tpu_custom_call.1} parent=1 // pred_check
      _
    $region39: #{tpu_custom_call.1} parent=1 // pred_check_branch
      %75 = sbr.rel (0) target = $region41
    $region40: #{tpu_custom_call.1} parent=1 // pred_region
      %76 = dma.done [#allocation6], 2048
    $region41: #{tpu_custom_call.1} parent=1 // pred_fallthru
      _
    // Predicated region
    $region42: #{tpu_custom_call.1} parent=1 // pred_check
      _
    $region43: #{tpu_custom_call.1} parent=1 // pred_check_branch
      %78 = sbr.rel (0) target = $region45
    $region44: #{tpu_custom_call.1} parent=1 // pred_region
      %79 = dma.done [#allocation9], 2048
    $region45: #{tpu_custom_call.1} parent=1 // pred_fallthru
      _
    %v80 = vld [vmem:[#allocation2] sm:$0xff]
    %v81 = vld [vmem:[#allocation2 + $0x8] sm:$0xff]
    %v82 = vld [vmem:[#allocation2 + $0x10] sm:$0xff]
    %v83 = vld [vmem:[#allocation2 + $0x18] sm:$0xff]
    %v84 = vld [vmem:[#allocation2 + $0x20] sm:$0xff]
    %v85 = vld [vmem:[#allocation2 + $0x28] sm:$0xff]
    %v86 = vld [vmem:[#allocation2 + $0x30] sm:$0xff]
    %v87 = vld [vmem:[#allocation5] sm:$0xff]
    %v88 = vld [vmem:[#allocation5 + $0x8] sm:$0xff]
    %v89 = vld [vmem:[#allocation5 + $0x10] sm:$0xff]
    %v90 = vld [vmem:[#allocation5 + $0x18] sm:$0xff]
    %v91 = vld [vmem:[#allocation5 + $0x20] sm:$0xff]
    %v92 = vld [vmem:[#allocation5 + $0x28] sm:$0xff]
    %v93 = vld [vmem:[#allocation5 + $0x30] sm:$0xff]
    %v94 = vld [vmem:[#allocation5 + $0x38] sm:$0xff]
    %v95 = vld [vmem:[#allocation5 + $0x40] sm:$0xff]
    %v96 = vld [vmem:[#allocation5 + $0x48] sm:$0xff]
    %v97 = vld [vmem:[#allocation5 + $0x50] sm:$0xff]
    %v98 = vld [vmem:[#allocation5 + $0x58] sm:$0xff]
    %v99 = vld [vmem:[#allocation5 + $0x60] sm:$0xff]
    %v100 = vld [vmem:[#allocation5 + $0x68] sm:$0xff]
    %v101 = vld [vmem:[#allocation5 + $0x70] sm:$0xff]
    %v102 = vld [vmem:[#allocation5 + $0x78] sm:$0xff]
    %v103 = vld [vmem:[#allocation5 + $0x80] sm:$0xff]
    %v104 = vld [vmem:[#allocation5 + $0x88] sm:$0xff]
    %v105 = vld [vmem:[#allocation5 + $0x90] sm:$0xff]
    %v106 = vld [vmem:[#allocation5 + $0x98] sm:$0xff]
    %v107 = vld [vmem:[#allocation5 + $0xa0] sm:$0xff]
    %v108 = vld [vmem:[#allocation5 + $0xa8] sm:$0xff]
    %v109 = vld [vmem:[#allocation5 + $0xb0] sm:$0xff]
    %v110 = vld [vmem:[#allocation5 + $0xb8] sm:$0xff]
    %v111 = vld [vmem:[#allocation5 + $0xc0] sm:$0xff]
    %v112 = vld [vmem:[#allocation5 + $0xc8] sm:$0xff]
    %v113 = vld [vmem:[#allocation5 + $0xd0] sm:$0xff]
    %v114 = vld [vmem:[#allocation5 + $0xd8] sm:$0xff]
    %v115 = vld [vmem:[#allocation5 + $0xe0] sm:$0xff]
    %v116 = vld [vmem:[#allocation5 + $0xe8] sm:$0xff]
    %v117 = vld [vmem:[#allocation5 + $0xf0] sm:$0xff]
    %v118 = vld [vmem:[#allocation5 + $0xf8] sm:$0xff]
    %v119 = vld [vmem:[#allocation5 + $0x100] sm:$0xff]
    %v120 = vld [vmem:[#allocation5 + $0x108] sm:$0xff]
    %v121 = vld [vmem:[#allocation5 + $0x110] sm:$0xff]
    %v122 = vld [vmem:[#allocation5 + $0x118] sm:$0xff]
    %v123 = vld [vmem:[#allocation5 + $0x120] sm:$0xff]
    %v124 = vld [vmem:[#allocation5 + $0x128] sm:$0xff]
    %v125 = vld [vmem:[#allocation5 + $0x130] sm:$0xff]
    %v126 = vld [vmem:[#allocation5 + $0x138] sm:$0xff]
    %v127 = vld [vmem:[#allocation5 + $0x140] sm:$0xff]
    %v128 = vld [vmem:[#allocation5 + $0x148] sm:$0xff]
    %v129 = vld [vmem:[#allocation5 + $0x150] sm:$0xff]
    %v130 = vld [vmem:[#allocation5 + $0x158] sm:$0xff]
    %v131 = vld [vmem:[#allocation5 + $0x160] sm:$0xff]
    %v132 = vld [vmem:[#allocation5 + $0x168] sm:$0xff]
    %v133 = vld [vmem:[#allocation5 + $0x170] sm:$0xff]
    %v134 = vld [vmem:[#allocation5 + $0x178] sm:$0xff]
    %v135 = vld [vmem:[#allocation5 + $0x180] sm:$0xff]
    %v136 = vld [vmem:[#allocation5 + $0x188] sm:$0xff]
    %v137 = vld [vmem:[#allocation5 + $0x190] sm:$0xff]
    %v138 = vld [vmem:[#allocation5 + $0x198] sm:$0xff]
    %v139 = vld [vmem:[#allocation5 + $0x1a0] sm:$0xff]
    %v140 = vld [vmem:[#allocation5 + $0x1a8] sm:$0xff]
    %v141 = vld [vmem:[#allocation5 + $0x1b0] sm:$0xff]
    %v142 = vld [vmem:[#allocation5 + $0x1b8] sm:$0xff]
    %v143 = vld [vmem:[#allocation5 + $0x1c0] sm:$0xff]
    %v144 = vld [vmem:[#allocation5 + $0x1c8] sm:$0xff]
    %v145 = vld [vmem:[#allocation5 + $0x1d0] sm:$0xff]
    %v146 = vld [vmem:[#allocation5 + $0x1d8] sm:$0xff]
    %v147 = vld [vmem:[#allocation5 + $0x1e0] sm:$0xff]
    %v148 = vld [vmem:[#allocation5 + $0x1e8] sm:$0xff]
    %v149 = vld [vmem:[#allocation5 + $0x1f0] sm:$0xff]
    %v150 = vld [vmem:[#allocation5 + $0x1f8] sm:$0xff]
    %v151 = vld [vmem:[#allocation5 + $0x200] sm:$0xff]
    %v152 = vld [vmem:[#allocation5 + $0x208] sm:$0xff]
    %v153 = vld [vmem:[#allocation5 + $0x210] sm:$0xff]
    %v154 = vld [vmem:[#allocation5 + $0x218] sm:$0xff]
    %v155 = vld [vmem:[#allocation5 + $0x220] sm:$0xff]
    %v156 = vld [vmem:[#allocation5 + $0x228] sm:$0xff]
    %v157 = vld [vmem:[#allocation5 + $0x230] sm:$0xff]
    %v158 = vld [vmem:[#allocation5 + $0x238] sm:$0xff]
    %v159 = vld [vmem:[#allocation5 + $0x240] sm:$0xff]
    %v160 = vld [vmem:[#allocation5 + $0x248] sm:$0xff]
    %v161 = vld [vmem:[#allocation5 + $0x250] sm:$0xff]
    %v162 = vld [vmem:[#allocation5 + $0x258] sm:$0xff]
    %v163 = vld [vmem:[#allocation5 + $0x260] sm:$0xff]
    %v164 = vld [vmem:[#allocation5 + $0x268] sm:$0xff]
    %v165 = vld [vmem:[#allocation5 + $0x270] sm:$0xff]
    %v166 = vld [vmem:[#allocation5 + $0x278] sm:$0xff]
    %v167 = vld [vmem:[#allocation5 + $0x280] sm:$0xff]
    %v168 = vld [vmem:[#allocation5 + $0x288] sm:$0xff]
    %v169 = vld [vmem:[#allocation5 + $0x290] sm:$0xff]
    %v170 = vld [vmem:[#allocation5 + $0x298] sm:$0xff]
    %v171 = vld [vmem:[#allocation5 + $0x2a0] sm:$0xff]
    %v172 = vld [vmem:[#allocation5 + $0x2a8] sm:$0xff]
    %v173 = vld [vmem:[#allocation5 + $0x2b0] sm:$0xff]
    %v174 = vld [vmem:[#allocation5 + $0x2b8] sm:$0xff]
    %v175 = vld [vmem:[#allocation5 + $0x2c0] sm:$0xff]
    %v176 = vld [vmem:[#allocation5 + $0x2c8] sm:$0xff]
    %v177 = vld [vmem:[#allocation5 + $0x2d0] sm:$0xff]
    %v178 = vld [vmem:[#allocation5 + $0x2d8] sm:$0xff]
    %v179 = vld [vmem:[#allocation5 + $0x2e0] sm:$0xff]
    %v180 = vld [vmem:[#allocation5 + $0x2e8] sm:$0xff]
    %v181 = vld [vmem:[#allocation5 + $0x2f0] sm:$0xff]
    %v182 = vld [vmem:[#allocation5 + $0x2f8] sm:$0xff]
    %v183 = vld [vmem:[#allocation5 + $0x300] sm:$0xff]
    %v184 = vld [vmem:[#allocation5 + $0x308] sm:$0xff]
    %v185 = vld [vmem:[#allocation5 + $0x310] sm:$0xff]
    %v186 = vld [vmem:[#allocation5 + $0x318] sm:$0xff]
    %v187 = vld [vmem:[#allocation5 + $0x320] sm:$0xff]
    %v188 = vld [vmem:[#allocation5 + $0x328] sm:$0xff]
    %v189 = vld [vmem:[#allocation5 + $0x330] sm:$0xff]
    %v190 = vld [vmem:[#allocation5 + $0x338] sm:$0xff]
    %v191 = vld [vmem:[#allocation5 + $0x340] sm:$0xff]
    %v192 = vld [vmem:[#allocation5 + $0x348] sm:$0xff]
    %v193 = vld [vmem:[#allocation5 + $0x350] sm:$0xff]
    %v194 = vld [vmem:[#allocation5 + $0x358] sm:$0xff]
    %v195 = vld [vmem:[#allocation5 + $0x360] sm:$0xff]
    %v196 = vld [vmem:[#allocation5 + $0x368] sm:$0xff]
    %v197 = vld [vmem:[#allocation5 + $0x370] sm:$0xff]
    %v198 = vld [vmem:[#allocation5 + $0x378] sm:$0xff]
    %v199 = vld [vmem:[%s2] sm:$0x1]
    %v201 = vlaneseq
    %v202 = vshrl.u32 %v201, 7
    %v203 = vsub.s32 0, %v202
    %v204 = vrot.slane %v199, %v203
    %206 = vmatprep.subr.mxu0 0.0
    %207 = vmatpush1.msra.mxu0 %v87
    %208 = vmatprep.subr.mxu0 0.0
    %209 = vmatpush1.msra.mxu0 %v88
    %210 = vmatprep.subr.mxu0 0.0
    %211 = vmatpush1.msra.mxu0 %v89
    %212 = vmatprep.subr.mxu0 0.0
    %213 = vmatpush1.msra.mxu0 %v90
    %214 = vmatprep.subr.mxu0 0.0
    %215 = vmatpush1.msra.mxu0 %v91
    %216 = vmatprep.subr.mxu0 0.0
    %217 = vmatpush1.msra.mxu0 %v92
    %218 = vmatprep.subr.mxu0 0.0
    %219 = vmatpush1.msra.mxu0 %v93
    %220 = vmatprep.subr.mxu0 0.0
    %221 = vmatpush1.msra.mxu0 %v94
    %222 = vmatprep.subr.mxu0 0.0
    %223 = vmatpush1.msra.mxu0 %v95
    %224 = vmatprep.subr.mxu0 0.0
    %225 = vmatpush1.msra.mxu0 %v96
    %226 = vmatprep.subr.mxu0 0.0
    %227 = vmatpush1.msra.mxu0 %v97
    %228 = vmatprep.subr.mxu0 0.0
    %229 = vmatpush1.msra.mxu0 %v98
    %230 = vmatprep.subr.mxu0 0.0
    %231 = vmatpush1.msra.mxu0 %v99
    %232 = vmatprep.subr.mxu0 0.0
    %233 = vmatpush1.msra.mxu0 %v100
    %234 = vmatprep.subr.mxu0 0.0
    %235 = vmatpush1.msra.mxu0 %v101
    %236 = vmatprep.subr.mxu0 0.0
    %237 = vmatpush1.msra.mxu0 %v102
    %238 = vmatprep.subr.mxu0 0.0
    %239 = vmatpush1.msra.mxu0 %v103
    %240 = vmatprep.subr.mxu0 0.0
    %241 = vmatpush1.msra.mxu0 %v104
    %242 = vmatprep.subr.mxu0 0.0
    %243 = vmatpush1.msra.mxu0 %v105
    %244 = vmatprep.subr.mxu0 0.0
    %245 = vmatpush1.msra.mxu0 %v106
    %246 = vmatprep.subr.mxu0 0.0
    %247 = vmatpush1.msra.mxu0 %v107
    %248 = vmatprep.subr.mxu0 0.0
    %249 = vmatpush1.msra.mxu0 %v108
    %250 = vmatprep.subr.mxu0 0.0
    %251 = vmatpush1.msra.mxu0 %v109
    %252 = vmatprep.subr.mxu0 0.0
    %253 = vmatpush1.msra.mxu0 %v110
    %254 = vmatprep.subr.mxu0 0.0
    %255 = vmatpush1.msra.mxu0 %v111
    %256 = vmatprep.subr.mxu0 0.0
    %257 = vmatpush1.msra.mxu0 %v112
    %258 = vmatprep.subr.mxu0 0.0
    %259 = vmatpush1.msra.mxu0 %v113
    %260 = vmatprep.subr.mxu0 0.0
    %261 = vmatpush1.msra.mxu0 %v114
    %262 = vmatprep.subr.mxu0 0.0
    %263 = vmatpush1.msra.mxu0 %v115
    %264 = vmatprep.subr.mxu0 0.0
    %265 = vmatpush1.msra.mxu0 %v116
    %266 = vmatprep.subr.mxu0 0.0
    %267 = vmatpush1.msra.mxu0 %v117
    %268 = vmatprep.subr.mxu0 0.0
    %269 = vmatpush1.msra.mxu0 %v118
    %270 = vmatprep.mubr.f32.mxu0 %v81
    %271 = vmatmul.mubr.f32.gmra.mrb[0].mxu0 %v80
    %v272 = vpop.f32.mrb[0].mxu0
    %v273 = vadd.f32 %v204, %v272
    %v274 = vpop.f32.mrb[0].mxu0
    %275 = vdwg.mxu0
    %276 = vmatprep.subr.mxu0 0.0
    %277 = vmatpush1.msra.mxu0 %v119
    %278 = vmatprep.subr.mxu0 0.0
    %279 = vmatpush1.msra.mxu0 %v120
    %280 = vmatprep.subr.mxu0 0.0
    %281 = vmatpush1.msra.mxu0 %v121
    %282 = vmatprep.subr.mxu0 0.0
    %283 = vmatpush1.msra.mxu0 %v122
    %284 = vmatprep.subr.mxu0 0.0
    %285 = vmatpush1.msra.mxu0 %v123
    %286 = vmatprep.subr.mxu0 0.0
    %287 = vmatpush1.msra.mxu0 %v124
    %288 = vmatprep.subr.mxu0 0.0
    %289 = vmatpush1.msra.mxu0 %v125
    %290 = vmatprep.subr.mxu0 0.0
    %291 = vmatpush1.msra.mxu0 %v126
    %292 = vmatprep.subr.mxu0 0.0
    %293 = vmatpush1.msra.mxu0 %v127
    %294 = vmatprep.subr.mxu0 0.0
    %295 = vmatpush1.msra.mxu0 %v128
    %296 = vmatprep.subr.mxu0 0.0
    %297 = vmatpush1.msra.mxu0 %v129
    %298 = vmatprep.subr.mxu0 0.0
    %299 = vmatpush1.msra.mxu0 %v130
    %300 = vmatprep.subr.mxu0 0.0
    %301 = vmatpush1.msra.mxu0 %v131
    %302 = vmatprep.subr.mxu0 0.0
    %303 = vmatpush1.msra.mxu0 %v132
    %304 = vmatprep.subr.mxu0 0.0
    %305 = vmatpush1.msra.mxu0 %v133
    %306 = vmatprep.subr.mxu0 0.0
    %307 = vmatpush1.msra.mxu0 %v134
    %308 = vmatprep.subr.mxu0 0.0
    %309 = vmatpush1.msra.mxu0 %v135
    %310 = vmatprep.subr.mxu0 0.0
    %311 = vmatpush1.msra.mxu0 %v136
    %312 = vmatprep.subr.mxu0 0.0
    %313 = vmatpush1.msra.mxu0 %v137
    %314 = vmatprep.subr.mxu0 0.0
    %315 = vmatpush1.msra.mxu0 %v138
    %316 = vmatprep.subr.mxu0 0.0
    %317 = vmatpush1.msra.mxu0 %v139
    %318 = vmatprep.subr.mxu0 0.0
    %319 = vmatpush1.msra.mxu0 %v140
    %320 = vmatprep.subr.mxu0 0.0
    %321 = vmatpush1.msra.mxu0 %v141
    %322 = vmatprep.subr.mxu0 0.0
    %323 = vmatpush1.msra.mxu0 %v142
    %324 = vmatprep.subr.mxu0 0.0
    %325 = vmatpush1.msra.mxu0 %v143
    %326 = vmatprep.subr.mxu0 0.0
    %327 = vmatpush1.msra.mxu0 %v144
    %328 = vmatprep.subr.mxu0 0.0
    %329 = vmatpush1.msra.mxu0 %v145
    %330 = vmatprep.subr.mxu0 0.0
    %331 = vmatpush1.msra.mxu0 %v146
    %332 = vmatprep.subr.mxu0 0.0
    %333 = vmatpush1.msra.mxu0 %v147
    %334 = vmatprep.subr.mxu0 0.0
    %335 = vmatpush1.msra.mxu0 %v148
    %336 = vmatprep.subr.mxu0 0.0
    %337 = vmatpush1.msra.mxu0 %v149
    %338 = vmatprep.subr.mxu0 0.0
    %339 = vmatpush1.msra.mxu0 %v150
    %340 = vmatprep.mubr.f32.mxu0 %v83
    %341 = vmatmul.mubr.f32.gmra.mrb[0].mxu0 %v82
    %v342 = vpop.f32.mrb[0].mxu0
    %v343 = vadd.f32 %v273, %v342
    %v344 = vpop.f32.mrb[0].mxu0
    %345 = vdwg.mxu0
    %346 = vmatprep.subr.mxu0 0.0
    %347 = vmatpush1.msra.mxu0 %v151
    %348 = vmatprep.subr.mxu0 0.0
    %349 = vmatpush1.msra.mxu0 %v152
    %350 = vmatprep.subr.mxu0 0.0
    %351 = vmatpush1.msra.mxu0 %v153
    %352 = vmatprep.subr.mxu0 0.0
    %353 = vmatpush1.msra.mxu0 %v154
    %354 = vmatprep.subr.mxu0 0.0
    %355 = vmatpush1.msra.mxu0 %v155
    %356 = vmatprep.subr.mxu0 0.0
    %357 = vmatpush1.msra.mxu0 %v156
    %358 = vmatprep.subr.mxu0 0.0
    %359 = vmatpush1.msra.mxu0 %v157
    %360 = vmatprep.subr.mxu0 0.0
    %361 = vmatpush1.msra.mxu0 %v158
    %362 = vmatprep.subr.mxu0 0.0
    %363 = vmatpush1.msra.mxu0 %v159
    %364 = vmatprep.subr.mxu0 0.0
    %365 = vmatpush1.msra.mxu0 %v160
    %366 = vmatprep.subr.mxu0 0.0
    %367 = vmatpush1.msra.mxu0 %v161
    %368 = vmatprep.subr.mxu0 0.0
    %369 = vmatpush1.msra.mxu0 %v162
    %370 = vmatprep.subr.mxu0 0.0
    %371 = vmatpush1.msra.mxu0 %v163
    %372 = vmatprep.subr.mxu0 0.0
    %373 = vmatpush1.msra.mxu0 %v164
    %374 = vmatprep.subr.mxu0 0.0
    %375 = vmatpush1.msra.mxu0 %v165
    %376 = vmatprep.subr.mxu0 0.0
    %377 = vmatpush1.msra.mxu0 %v166
    %378 = vmatprep.subr.mxu0 0.0
    %379 = vmatpush1.msra.mxu0 %v167
    %380 = vmatprep.subr.mxu0 0.0
    %381 = vmatpush1.msra.mxu0 %v168
    %382 = vmatprep.subr.mxu0 0.0
    %383 = vmatpush1.msra.mxu0 %v169
    %384 = vmatprep.subr.mxu0 0.0
    %385 = vmatpush1.msra.mxu0 %v170
    %386 = vmatprep.subr.mxu0 0.0
    %387 = vmatpush1.msra.mxu0 %v171
    %388 = vmatprep.subr.mxu0 0.0
    %389 = vmatpush1.msra.mxu0 %v172
    %390 = vmatprep.subr.mxu0 0.0
    %391 = vmatpush1.msra.mxu0 %v173
    %392 = vmatprep.subr.mxu0 0.0
    %393 = vmatpush1.msra.mxu0 %v174
    %394 = vmatprep.subr.mxu0 0.0
    %395 = vmatpush1.msra.mxu0 %v175
    %396 = vmatprep.subr.mxu0 0.0
    %397 = vmatpush1.msra.mxu0 %v176
    %398 = vmatprep.subr.mxu0 0.0
    %399 = vmatpush1.msra.mxu0 %v177
    %400 = vmatprep.subr.mxu0 0.0
    %401 = vmatpush1.msra.mxu0 %v178
    %402 = vmatprep.subr.mxu0 0.0
    %403 = vmatpush1.msra.mxu0 %v179
    %404 = vmatprep.subr.mxu0 0.0
    %405 = vmatpush1.msra.mxu0 %v180
    %406 = vmatprep.subr.mxu0 0.0
    %407 = vmatpush1.msra.mxu0 %v181
    %408 = vmatprep.subr.mxu0 0.0
    %409 = vmatpush1.msra.mxu0 %v182
    %410 = vmatprep.mubr.f32.mxu0 %v85
    %411 = vmatmul.mubr.f32.gmra.mrb[0].mxu0 %v84
    %v412 = vpop.f32.mrb[0].mxu0
    %v413 = vadd.f32 %v343, %v412
    %v414 = vpop.f32.mrb[0].mxu0
    %415 = vdwg.mxu0
    %416 = vmatprep.subr.mxu0 0.0
    %417 = vmatpush1.msra.mxu0 %v183
    %418 = vmatprep.subr.mxu0 0.0
    %419 = vmatpush1.msra.mxu0 %v184
    %420 = vmatprep.subr.mxu0 0.0
    %421 = vmatpush1.msra.mxu0 %v185
    %422 = vmatprep.subr.mxu0 0.0
    %423 = vmatpush1.msra.mxu0 %v186
    %424 = vmatprep.subr.mxu0 0.0
    %425 = vmatpush1.msra.mxu0 %v187
    %426 = vmatprep.subr.mxu0 0.0
    %427 = vmatpush1.msra.mxu0 %v188
    %428 = vmatprep.subr.mxu0 0.0
    %429 = vmatpush1.msra.mxu0 %v189
    %430 = vmatprep.subr.mxu0 0.0
    %431 = vmatpush1.msra.mxu0 %v190
    %432 = vmatprep.subr.mxu0 0.0
    %433 = vmatpush1.msra.mxu0 %v191
    %434 = vmatprep.subr.mxu0 0.0
    %435 = vmatpush1.msra.mxu0 %v192
    %436 = vmatprep.subr.mxu0 0.0
    %437 = vmatpush1.msra.mxu0 %v193
    %438 = vmatprep.subr.mxu0 0.0
    %439 = vmatpush1.msra.mxu0 %v194
    %440 = vmatprep.subr.mxu0 0.0
    %441 = vmatpush1.msra.mxu0 %v195
    %442 = vmatprep.subr.mxu0 0.0
    %443 = vmatpush1.msra.mxu0 %v196
    %444 = vmatprep.subr.mxu0 0.0
    %445 = vmatpush1.msra.mxu0 %v197
    %446 = vmatprep.subr.mxu0 0.0
    %447 = vmatpush1.msra.mxu0 %v198
    %448 = vmatprep.subr.mxu0 0.0
    %449 = vmatpush1.msra.mxu0 0.0
    %450 = vmatprep.subr.mxu0 0.0
    %451 = vmatpush1.msra.mxu0 0.0
    %452 = vmatprep.subr.mxu0 0.0
    %453 = vmatpush1.msra.mxu0 0.0
    %454 = vmatprep.subr.mxu0 0.0
    %455 = vmatpush1.msra.mxu0 0.0
    %456 = vmatprep.subr.mxu0 0.0
    %457 = vmatpush1.msra.mxu0 0.0
    %458 = vmatprep.subr.mxu0 0.0
    %459 = vmatpush1.msra.mxu0 0.0
    %460 = vmatprep.subr.mxu0 0.0
    %461 = vmatpush1.msra.mxu0 0.0
    %462 = vmatprep.subr.mxu0 0.0
    %463 = vmatpush1.msra.mxu0 0.0
    %464 = vmatprep.subr.mxu0 0.0
    %465 = vmatpush1.msra.mxu0 0.0
    %466 = vmatprep.subr.mxu0 0.0
    %467 = vmatpush1.msra.mxu0 0.0
    %468 = vmatprep.subr.mxu0 0.0
    %469 = vmatpush1.msra.mxu0 0.0
    %470 = vmatprep.subr.mxu0 0.0
    %471 = vmatpush1.msra.mxu0 0.0
    %472 = vmatprep.subr.mxu0 0.0
    %473 = vmatpush1.msra.mxu0 0.0
    %474 = vmatprep.subr.mxu0 0.0
    %475 = vmatpush1.msra.mxu0 0.0
    %476 = vmatprep.subr.mxu0 0.0
    %477 = vmatpush1.msra.mxu0 0.0
    %478 = vmatprep.subr.mxu0 0.0
    %479 = vmatpush1.msra.mxu0 0.0
    %480 = vmatprep.mubr.f32.mxu0 0.0
    %481 = vmatmul.mubr.f32.gmra.mrb[0].mxu0 %v86
    %v482 = vpop.f32.mrb[0].mxu0
    %v483 = vadd.f32 %v413, %v482
    %v484 = vpop.f32.mrb[0].mxu0
    %485 = vdwg.mxu0
    %v486 = vmax.f32 %v483, 0.0
    %v487 = vld [vmem:[#allocation7] sm:$0xff]
    %v488 = vld [vmem:[#allocation7 + $0x8] sm:$0xff]
    %v489 = vld [vmem:[#allocation7 + $0x10] sm:$0xff]
    %v490 = vld [vmem:[#allocation7 + $0x18] sm:$0xff]
    %v491 = vld [vmem:[#allocation7 + $0x20] sm:$0xff]
    %v492 = vld [vmem:[#allocation7 + $0x28] sm:$0xff]
    %v493 = vld [vmem:[#allocation7 + $0x30] sm:$0xff]
    %v494 = vld [vmem:[#allocation7 + $0x38] sm:$0xff]
    %v495 = vld [vmem:[#allocation7 + $0x40] sm:$0xff]
    %v496 = vld [vmem:[#allocation7 + $0x48] sm:$0xff]
    %v497 = vld [vmem:[#allocation7 + $0x50] sm:$0xff]
    %v498 = vld [vmem:[#allocation7 + $0x58] sm:$0xff]
    %v499 = vld [vmem:[#allocation7 + $0x60] sm:$0xff]
    %v500 = vld [vmem:[#allocation7 + $0x68] sm:$0xff]
    %v501 = vld [vmem:[#allocation7 + $0x70] sm:$0xff]
    %v502 = vld [vmem:[#allocation7 + $0x78] sm:$0xff]
    %v503 = vld [vmem:[%s4] sm:$0x1]
    %v505 = vlaneseq
    %v506 = vshrl.u32 %v505, 7
    %v507 = vsub.s32 0, %v506
    %v508 = vrot.slane %v503, %v507
    %510 = vmatprep.subr.mxu0 0.0
    %511 = vmatpush1.msra.mxu0 %v487
    %512 = vmatprep.subr.mxu0 0.0
    %513 = vmatpush1.msra.mxu0 %v488
    %514 = vmatprep.subr.mxu0 0.0
    %515 = vmatpush1.msra.mxu0 %v489
    %516 = vmatprep.subr.mxu0 0.0
    %517 = vmatpush1.msra.mxu0 %v490
    %518 = vmatprep.subr.mxu0 0.0
    %519 = vmatpush1.msra.mxu0 %v491
    %520 = vmatprep.subr.mxu0 0.0
    %521 = vmatpush1.msra.mxu0 %v492
    %522 = vmatprep.subr.mxu0 0.0
    %523 = vmatpush1.msra.mxu0 %v493
    %524 = vmatprep.subr.mxu0 0.0
    %525 = vmatpush1.msra.mxu0 %v494
    %526 = vmatprep.subr.mxu0 0.0
    %527 = vmatpush1.msra.mxu0 %v495
    %528 = vmatprep.subr.mxu0 0.0
    %529 = vmatpush1.msra.mxu0 %v496
    %530 = vmatprep.subr.mxu0 0.0
    %531 = vmatpush1.msra.mxu0 %v497
    %532 = vmatprep.subr.mxu0 0.0
    %533 = vmatpush1.msra.mxu0 %v498
    %534 = vmatprep.subr.mxu0 0.0
    %535 = vmatpush1.msra.mxu0 %v499
    %536 = vmatprep.subr.mxu0 0.0
    %537 = vmatpush1.msra.mxu0 %v500
    %538 = vmatprep.subr.mxu0 0.0
    %539 = vmatpush1.msra.mxu0 %v501
    %540 = vmatprep.subr.mxu0 0.0
    %541 = vmatpush1.msra.mxu0 %v502
    %542 = vmatprep.subr.mxu0 0.0
    %543 = vmatpush1.msra.mxu0 0.0
    %544 = vmatprep.subr.mxu0 0.0
    %545 = vmatpush1.msra.mxu0 0.0
    %546 = vmatprep.subr.mxu0 0.0
    %547 = vmatpush1.msra.mxu0 0.0
    %548 = vmatprep.subr.mxu0 0.0
    %549 = vmatpush1.msra.mxu0 0.0
    %550 = vmatprep.subr.mxu0 0.0
    %551 = vmatpush1.msra.mxu0 0.0
    %552 = vmatprep.subr.mxu0 0.0
    %553 = vmatpush1.msra.mxu0 0.0
    %554 = vmatprep.subr.mxu0 0.0
    %555 = vmatpush1.msra.mxu0 0.0
    %556 = vmatprep.subr.mxu0 0.0
    %557 = vmatpush1.msra.mxu0 0.0
    %558 = vmatprep.subr.mxu0 0.0
    %559 = vmatpush1.msra.mxu0 0.0
    %560 = vmatprep.subr.mxu0 0.0
    %561 = vmatpush1.msra.mxu0 0.0
    %562 = vmatprep.subr.mxu0 0.0
    %563 = vmatpush1.msra.mxu0 0.0
    %564 = vmatprep.subr.mxu0 0.0
    %565 = vmatpush1.msra.mxu0 0.0
    %566 = vmatprep.subr.mxu0 0.0
    %567 = vmatpush1.msra.mxu0 0.0
    %568 = vmatprep.subr.mxu0 0.0
    %569 = vmatpush1.msra.mxu0 0.0
    %570 = vmatprep.subr.mxu0 0.0
    %571 = vmatpush1.msra.mxu0 0.0
    %572 = vmatprep.subr.mxu0 0.0
    %573 = vmatpush1.msra.mxu0 0.0
    %574 = vmatprep.mubr.f32.mxu0 0.0
    %575 = vmatmul.mubr.f32.gmra.mrb[0].mxu0 %v486
    %v576 = vpop.f32.mrb[0].mxu0
    %v577 = vadd.f32 %v508, %v576
    %v578 = vpop.f32.mrb[0].mxu0
    %579 = vdwg.mxu0
    %v580 = vmax.f32 %v577, 0.0
    %v581 = vld [vmem:[#allocation8] sm:$0xff]
    %v582 = vld [vmem:[#allocation8 + $0x8] sm:$0xff]
    %v583 = vld [vmem:[#allocation8 + $0x10] sm:$0xff]
    %v584 = vld [vmem:[#allocation8 + $0x18] sm:$0xff]
    %v585 = vld [vmem:[#allocation8 + $0x20] sm:$0xff]
    %v586 = vld [vmem:[#allocation8 + $0x28] sm:$0xff]
    %v587 = vld [vmem:[#allocation8 + $0x30] sm:$0xff]
    %v588 = vld [vmem:[#allocation8 + $0x38] sm:$0xff]
    %v589 = vld [vmem:[#allocation8 + $0x40] sm:$0xff]
    %v590 = vld [vmem:[#allocation8 + $0x48] sm:$0xff]
    %v591 = vld [vmem:[#allocation8 + $0x50] sm:$0xff]
    %v592 = vld [vmem:[#allocation8 + $0x58] sm:$0xff]
    %v593 = vld [vmem:[#allocation8 + $0x60] sm:$0xff]
    %v594 = vld [vmem:[#allocation8 + $0x68] sm:$0xff]
    %v595 = vld [vmem:[#allocation8 + $0x70] sm:$0xff]
    %v596 = vld [vmem:[#allocation8 + $0x78] sm:$0xff]
    %v597 = vld [vmem:[%s6] sm:$0x1]
    %v599 = vlaneseq
    %v600 = vshrl.u32 %v599, 7
    %v601 = vsub.s32 0, %v600
    %v602 = vrot.slane %v597, %v601
    %604 = vmatprep.subr.mxu0 0.0
    %605 = vmatpush1.msra.mxu0 %v581
    %606 = vmatprep.subr.mxu0 0.0
    %607 = vmatpush1.msra.mxu0 %v582
    %608 = vmatprep.subr.mxu0 0.0
    %609 = vmatpush1.msra.mxu0 %v583
    %610 = vmatprep.subr.mxu0 0.0
    %611 = vmatpush1.msra.mxu0 %v584
    %612 = vmatprep.subr.mxu0 0.0
    %613 = vmatpush1.msra.mxu0 %v585
    %614 = vmatprep.subr.mxu0 0.0
    %615 = vmatpush1.msra.mxu0 %v586
    %616 = vmatprep.subr.mxu0 0.0
    %617 = vmatpush1.msra.mxu0 %v587
    %618 = vmatprep.subr.mxu0 0.0
    %619 = vmatpush1.msra.mxu0 %v588
    %620 = vmatprep.subr.mxu0 0.0
    %621 = vmatpush1.msra.mxu0 %v589
    %622 = vmatprep.subr.mxu0 0.0
    %623 = vmatpush1.msra.mxu0 %v590
    %624 = vmatprep.subr.mxu0 0.0
    %625 = vmatpush1.msra.mxu0 %v591
    %626 = vmatprep.subr.mxu0 0.0
    %627 = vmatpush1.msra.mxu0 %v592
    %628 = vmatprep.subr.mxu0 0.0
    %629 = vmatpush1.msra.mxu0 %v593
    %630 = vmatprep.subr.mxu0 0.0
    %631 = vmatpush1.msra.mxu0 %v594
    %632 = vmatprep.subr.mxu0 0.0
    %633 = vmatpush1.msra.mxu0 %v595
    %634 = vmatprep.subr.mxu0 0.0
    %635 = vmatpush1.msra.mxu0 %v596
    %636 = vmatprep.subr.mxu0 0.0
    %637 = vmatpush1.msra.mxu0 0.0
    %638 = vmatprep.subr.mxu0 0.0
    %639 = vmatpush1.msra.mxu0 0.0
    %640 = vmatprep.subr.mxu0 0.0
    %641 = vmatpush1.msra.mxu0 0.0
    %642 = vmatprep.subr.mxu0 0.0
    %643 = vmatpush1.msra.mxu0 0.0
    %644 = vmatprep.subr.mxu0 0.0
    %645 = vmatpush1.msra.mxu0 0.0
    %646 = vmatprep.subr.mxu0 0.0
    %647 = vmatpush1.msra.mxu0 0.0
    %648 = vmatprep.subr.mxu0 0.0
    %649 = vmatpush1.msra.mxu0 0.0
    %650 = vmatprep.subr.mxu0 0.0
    %651 = vmatpush1.msra.mxu0 0.0
    %652 = vmatprep.subr.mxu0 0.0
    %653 = vmatpush1.msra.mxu0 0.0
    %654 = vmatprep.subr.mxu0 0.0
    %655 = vmatpush1.msra.mxu0 0.0
    %656 = vmatprep.subr.mxu0 0.0
    %657 = vmatpush1.msra.mxu0 0.0
    %658 = vmatprep.subr.mxu0 0.0
    %659 = vmatpush1.msra.mxu0 0.0
    %660 = vmatprep.subr.mxu0 0.0
    %661 = vmatpush1.msra.mxu0 0.0
    %662 = vmatprep.subr.mxu0 0.0
    %663 = vmatpush1.msra.mxu0 0.0
    %664 = vmatprep.subr.mxu0 0.0
    %665 = vmatpush1.msra.mxu0 0.0
    %666 = vmatprep.subr.mxu0 0.0
    %667 = vmatpush1.msra.mxu0 0.0
    %668 = vmatprep.mubr.f32.mxu0 0.0
    %669 = vmatmul.mubr.f32.gmra.mrb[0].mxu0 %v580
    %v670 = vpop.f32.mrb[0].mxu0
    %v671 = vadd.f32 %v602, %v670
    %v672 = vpop.f32.mrb[0].mxu0
    %673 = vdwg.mxu0
    %674 = vst [vmem:[#allocation10] sm:$0xff] %v671
    // Predicated region
    $region46: #{tpu_custom_call.1} parent=1 // pred_check
      _
    $region47: #{tpu_custom_call.1} parent=1 // pred_check_branch
      %676 = sbr.rel (0) target = $region49
    $region48: #{tpu_custom_call.1} parent=1 // pred_region
      %s678 = ssub.s32 128, 128
      %679 = vsyncadd [#allocation4], %s678
      %s681 = sshll.u32 [#allocation10], 4
      %s682 = int_to_ptr.vmem [resolvable:$true] %s681
      %684 = dma.vmem_to_hbm [thread:$0]  %s682, 128, %s7, [#allocation4]
    $region49: #{tpu_custom_call.1} parent=1 // pred_fallthru
      _
    // Predicated region
    $region50: #{tpu_custom_call.1} parent=1 // pred_check
      _
    $region51: #{tpu_custom_call.1} parent=1 // pred_check_branch
      %686 = sbr.rel (0) target = $region53
    $region52: #{tpu_custom_call.1} parent=1 // pred_region
      %687 = dma.done [#allocation4], 128
    $region53: #{tpu_custom_call.1} parent=1 // pred_fallthru
      _
    %688 = vsyncpa [#allocation3], 1
    %689 = vsyncpa [#allocation6], 1
    %690 = vsyncpa [#allocation9], 1
    %691 = vsyncpa [#allocation4], 1

</llo_original>
